<compile_context>
chip_gen: v7x
topology: tpu7x:2x2x1
jax: 0.10.0
libtpu: 0.0.40
codegen_flags: <defaults>
</compile_context>

<pallas_src>
import math

import jax
import jax.numpy as jnp
from jax.experimental import pallas as pl
from jax.experimental.pallas import tpu as pltpu


# ----------------------------------------------------------------------------
# Kernel body
# ----------------------------------------------------------------------------
def _threshgate_kernel(acts_ref, gate_ref, out_ref):
    acts = acts_ref[...]
    gate = gate_ref[...]
    relu = jnp.maximum(acts, jnp.zeros_like(acts))
    # NOTE: jnp.where zeroes NaNs where gate <= 0 (PyTorch's NaN * 0 -> NaN);
    # acceptable divergence for a gating nonlinearity.
    out_ref[...] = jnp.where(gate > 0, relu, jnp.zeros_like(relu))


# ----------------------------------------------------------------------------
# Helpers
# ----------------------------------------------------------------------------
def _ceil_to(x: int, m: int) -> int:
    return ((x + m - 1) // m) * m


def _num_tensorcores() -> int:
    """Best-effort TensorCore count per chip (1 on v5e/v6e, 2 on v7x).

    Falls back to 1 (never force a split) if the info is unavailable.
    """
    try:
        info = pltpu.get_tpu_info()
        for attr in ("num_cores", "core_count", "num_tensorcores",
                     "tensorcore_count", "num_tensor_cores"):
            v = getattr(info, attr, None)
            if isinstance(v, int) and v > 0:
                return v
    except Exception:
        pass
    try:
        d = jax.devices()[0]
        for attr in ("num_cores", "core_count"):
            v = getattr(d, attr, None)
            if isinstance(v, int) and v > 0:
                return v
    except Exception:
        pass
    return 1


def threshgate_xla(acts: jax.Array, gate_acts: jax.Array) -> jax.Array:
    """Plain-jnp variant: prefer this where XLA can fuse into neighboring ops."""
    zero = jnp.zeros((), acts.dtype)
    return jnp.where(gate_acts > 0, jnp.maximum(acts, zero), zero)


# ----------------------------------------------------------------------------
# Pallas wrapper
# ----------------------------------------------------------------------------
def threshgate(acts: jax.Array, gate_acts: jax.Array,
               *, block_bytes: int = 2 * 1024 * 1024,
               max_lane: int = 1024) -> jax.Array:
    """Elementwise ThreshGate forward: relu(acts) * (gate_acts > 0)."""
    assert acts.shape == gate_acts.shape, "acts and gate_acts must match shape"
    orig_shape = acts.shape
    out_dtype = acts.dtype
    n = math.prod(orig_shape) if orig_shape else 1

    if n == 0:
        return threshgate_xla(acts, gate_acts)

    itemsize_a = jnp.dtype(acts.dtype).itemsize
    itemsize_g = jnp.dtype(gate_acts.dtype).itemsize
    itemsize_max = max(itemsize_a, itemsize_g)
    # Sublane multiple follows the narrowest dtype so packed dtypes fill vregs
    # (8 rows/vreg for 32-bit, 16 for bf16, 32 for int8).
    sub = max(8, 32 // min(itemsize_a, itemsize_g))

    # --- lane-dense 2-D view: (rows, C) with C any multiple of 128 -----------
    lane_c = 0
    for cand in range(max_lane, 127, -128):      # widest multiple of 128 first
        if n % cand == 0:
            lane_c = cand
            break

    pad_n = 0
    if lane_c:
        flat_shape = (n // lane_c, lane_c)
    elif len(orig_shape) >= 2 and orig_shape[-1] >= 128:
        # No clean lane-dense factorization; natural 2-D view with a
        # full-extent last dim (always a legal block shape, contiguous DMA).
        flat_shape = (math.prod(orig_shape[:-1]), orig_shape[-1])
    else:
        # Odd 1-D / tiny-last-dim case: pad flat to a lane-dense (rows, 1024)
        # view so blocks use full sublane/lane density; slice the output after.
        n_pad = _ceil_to(n, max_lane)
        pad_n = n_pad - n
        flat_shape = (n_pad // max_lane, max_lane)

    if pad_n:
        a2 = jnp.pad(acts.reshape(-1), (0, pad_n)).reshape(flat_shape)
        g2 = jnp.pad(gate_acts.reshape(-1), (0, pad_n)).reshape(flat_shape)
    else:
        a2 = acts.reshape(flat_shape)
        g2 = gate_acts.reshape(flat_shape)

    rows, cols = flat_shape

    # --- block shapes ---------------------------------------------------------
    # Default: full-extent last dim -> contiguous HBM DMA, wide unmasked vst,
    # 1-D grid. Only tile lanes if even a minimum-height full-width block would
    # blow the per-operand budget by >4x (very wide last dims).
    tf = cols
    if cols % 128 == 0 and cols * itemsize_max * sub > 4 * block_bytes:
        tf = max(128, min(cols, 8 * max_lane))

    rows_target = max(1, block_bytes // max(1, tf * itemsize_max))
    tb = min(rows, _ceil_to(rows_target, sub))
    if tb >= rows:
        tb = rows                                  # full-extent rows: always legal

    grid_r = pl.cdiv(rows, tb)

    # Megacore row split: only when the chip really has >1 TensorCore (v7x).
    # Aim for >=2 balanced blocks per core so per-core double-buffering overlaps
    # DMA; never split on single-TC v5e/v6e (pure per-step overhead).
    num_tc = _num_tensorcores()
    if num_tc >= 2 and grid_r < 2 * num_tc and rows >= 2 * num_tc * sub:
        chosen = None
        for target in (2 * num_tc, num_tc):
            cand_tb = min(rows, _ceil_to(pl.cdiv(rows, target), sub))
            cand_grid = pl.cdiv(rows, cand_tb)
            if cand_grid % num_tc == 0:            # balanced across cores
                chosen = (cand_tb, cand_grid)
                break
        if chosen is None:
            cand_tb = min(rows, _ceil_to(pl.cdiv(rows, 2 * num_tc), sub))
            chosen = (cand_tb, pl.cdiv(rows, cand_tb))
        tb, grid_r = chosen

    grid_f = pl.cdiv(cols, tf)

    if grid_f == 1:
        grid = (grid_r,)
        in_spec = pl.BlockSpec((tb, tf), lambda i: (i, 0))
        out_spec = pl.BlockSpec((tb, tf), lambda i: (i, 0))
        dims = ("parallel",)
    else:
        grid = (grid_r, grid_f)
        in_spec = pl.BlockSpec((tb, tf), lambda i, j: (i, j))
        out_spec = pl.BlockSpec((tb, tf), lambda i, j: (i, j))
        dims = ("parallel", "parallel")

    out2 = pl.pallas_call(
        _threshgate_kernel,
        out_shape=jax.ShapeDtypeStruct(flat_shape, out_dtype),
        grid_spec=pltpu.PrefetchScalarGridSpec(
            num_scalar_prefetch=0,
            grid=grid,
            in_specs=[in_spec, in_spec],
            out_specs=out_spec,
        ),
        compiler_params=pltpu.CompilerParams(
            dimension_semantics=dims,
            # 3 operands x 2 buffers x ~2 MiB ≈ 12 MiB live; 32 MiB scoped limit
            # is within physical VMEM on v5e/v6e (128 MiB) and v7x (64 MiB).
            vmem_limit_bytes=32 * 1024 * 1024,
        ),
    )(a2, g2)

    if pad_n:
        return out2.reshape(-1)[:n].reshape(orig_shape)
    return out2.reshape(orig_shape)


# ----------------------------------------------------------------------------
# Reference + demo
# ----------------------------------------------------------------------------
def threshgate_ref(acts, gate_acts):
    return jnp.maximum(acts, 0).astype(acts.dtype) * (gate_acts > 0).astype(acts.dtype)


if __name__ == "__main__":
    key = jax.random.PRNGKey(0)

    # Main small demo: batch=8, features=256 (lane-dense fast path).
    k1, k2, k3, k4, k5, k6, k7, k8 = jax.random.split(key, 8)
    B, F = 8, 256
    acts = jax.random.normal(k1, (B, F), dtype=jnp.float32)
    gate_acts = jax.random.normal(k2, (B, F), dtype=jnp.float32)
    out = jax.block_until_ready(threshgate(acts, gate_acts))
    ref = threshgate_ref(acts, gate_acts)
    assert out.shape == ref.shape and out.dtype == ref.dtype
    assert jnp.allclose(out, ref), "mismatch on (8, 256) f32"

    # Non-power-of-two lane-dense factorization (cols=384 -> lane 768).
    a = jax.random.normal(k3, (4, 384), dtype=jnp.bfloat16)
    g = jax.random.normal(k4, (4, 384), dtype=jnp.float32)   # mixed gate dtype
    o = jax.block_until_ready(threshgate(a, g))
    assert o.dtype == a.dtype
    assert jnp.array_equal(o, threshgate_ref(a, g)), "mismatch on (4, 384) bf16"

    # Natural 2-D fallback (no 128-multiple divisor, last dim >= 128).
    a = jax.random.normal(k5, (6, 200), dtype=jnp.float32)
    g = jax.random.normal(k6, (6, 200), dtype=jnp.float32)
    o = jax.block_until_ready(threshgate(a, g))
    assert jnp.allclose(o, threshgate_ref(a, g)), "mismatch on (6, 200) f32"

    # Odd small-shape path (padded lane-dense fallback).
    a = jax.random.normal(k7, (3, 5, 7), dtype=jnp.float32)
    g = jax.random.normal(k8, (3, 5, 7), dtype=jnp.float32)
    o = jax.block_until_ready(threshgate(a, g))
    assert jnp.allclose(o, threshgate_ref(a, g)), "mismatch on (3, 5, 7) f32"

    print("KERNEL_OK")
</pallas_src>

<mosaic_0001>
module attributes {stable_mosaic.version = 11 : i64} {
  func.func @_threshgate_kernel(%arg0: i32, %arg1: memref<2x1024xf32, #tpu.memory_space<vmem>>, %arg2: memref<2x1024xf32, #tpu.memory_space<vmem>>, %arg3: memref<2x1024xf32, #tpu.memory_space<vmem>>) attributes {dimension_semantics = [#tpu.dimension_semantics<parallel>], iteration_bounds = array<i64: 1>, scalar_prefetch = 0 : i64, scratch_operands = 0 : i64, tpu.core_type = #tpu.core_type<tc>, window_params = [{transform_indices = @transform_0, window_bounds = array<i64: 2, 1024>}, {transform_indices = @transform_1, window_bounds = array<i64: 2, 1024>}, {transform_indices = @transform_2, window_bounds = array<i64: 2, 1024>}]} {
    %c0 = arith.constant 0 : index
    %c0_0 = arith.constant 0 : index
    %0 = vector.load %arg1[%c0, %c0_0] : memref<2x1024xf32, #tpu.memory_space<vmem>>, vector<2x1024xf32>
    %c0_1 = arith.constant 0 : index
    %c0_2 = arith.constant 0 : index
    %1 = vector.load %arg2[%c0_1, %c0_2] : memref<2x1024xf32, #tpu.memory_space<vmem>>, vector<2x1024xf32>
    %cst = arith.constant 0.000000e+00 : f32
    %2 = vector.broadcast %cst : f32 to vector<2x1024xf32>
    %3 = arith.maximumf %0, %2 : vector<2x1024xf32>
    %cst_3 = arith.constant 0.000000e+00 : f32
    %4 = vector.broadcast %cst_3 : f32 to vector<2x1024xf32>
    %5 = arith.cmpf ogt, %1, %4 : vector<2x1024xf32>
    %cst_4 = arith.constant 0.000000e+00 : f32
    %6 = vector.broadcast %cst_4 : f32 to vector<2x1024xf32>
    %7 = arith.select %5, %3, %6 : vector<2x1024xi1>, vector<2x1024xf32>
    %c0_5 = arith.constant 0 : index
    %c0_6 = arith.constant 0 : index
    %8 = vector.load %arg3[%c0_5, %c0_6] : memref<2x1024xf32, #tpu.memory_space<vmem>>, vector<2x1024xf32>
    tpu.vector_store %arg3[%c0_5, %c0_6], %7 {strides = array<i32>} : memref<2x1024xf32, #tpu.memory_space<vmem>>, vector<2x1024xf32>,
    return
  }
  func.func @transform_0(%arg0: i32) -> (i32, i32) {
    %c0_i32 = arith.constant 0 : i32
    %c0_i32_0 = arith.constant 0 : i32
    return %arg0, %c0_i32 : i32, i32
  }
  func.func @transform_1(%arg0: i32) -> (i32, i32) {
    %c0_i32 = arith.constant 0 : i32
    %c0_i32_0 = arith.constant 0 : i32
    return %arg0, %c0_i32 : i32, i32
  }
  func.func @transform_2(%arg0: i32) -> (i32, i32) {
    %c0_i32 = arith.constant 0 : i32
    %c0_i32_0 = arith.constant 0 : i32
    return %arg0, %c0_i32 : i32, i32
  }
}

</mosaic_0001>

<llo_original>
// kernel: tpu_custom_call.1
$region0: #{tpu_custom_call.1}
  #allocation0 [shape = 'u32[]', space=smem, size = 0x4, offset = 0x4, fixed_abs, tag = 'smem constant byte address 0x4 - core index']
  #allocation1 [shape = 'u32[144,128]{1,0:T(1,128)}', space=vmem, size = 0x12000, scoped, tag = 'internal scratch']
  %s0 = inlined_call_operand.hbm [shape: f32[2,1024], index: 0, kind: input, shape index: {}]
  %s1 = inlined_call_operand.hbm [shape: f32[2,1024], index: 1, kind: input, shape index: {}]
  %s2 = inlined_call_operand.hbm [shape: f32[2,1024], index: 2, kind: output, shape index: {}]
  %s3 = sld [smem:[#allocation0]]
  $region26: #{tpu_custom_call.1} parent=0
    _
  %s5 = ssub.s32 1, %s3
  %s6 = scalar_select 0, %s5, %s3
  $region1: #{tpu_custom_call.1} parent=0
    #allocation2 [shape = 'u8[8192]{0}', space=vmem, size = 0x2000, scoped, tag = 'input window, operand 0, single buffered']
    #allocation3 [shape = 's32[1]{0}', space=sflag, size = 0x4, scoped, tag = 'scoped memory for tpu_custom_call.1']
    #allocation4 [shape = 's32[1]{0}', space=sflag, size = 0x4, scoped, tag = 'scoped memory for tpu_custom_call.1']
    #allocation5 [shape = 'u8[8192]{0}', space=vmem, size = 0x2000, scoped, tag = 'input window, operand 1, single buffered']
    #allocation6 [shape = 's32[1]{0}', space=sflag, size = 0x4, scoped, tag = 'scoped memory for tpu_custom_call.1']
    #allocation7 [shape = 'u8[8192]{0}', space=vmem, size = 0x2000, scoped, tag = 'output window, operand 0, single buffered']
    %7 = vsyncpa [#allocation3], 0
    %8 = vsyncpa [#allocation6], 0
    %9 = vsyncpa [#allocation4], 0
    // Predicated region
    $region2: #{tpu_custom_call.1} parent=1 // pred_check
      _
    $region3: #{tpu_custom_call.1} parent=1 // pred_check_branch
      %11 = sbr.rel (0) target = $region5
    $region4: #{tpu_custom_call.1} parent=1 // pred_region
      %s13 = ssub.s32 256, 256
      %14 = vsyncadd [#allocation3], %s13
      %s16 = sshll.u32 [#allocation2], 4
      %s17 = int_to_ptr.vmem [resolvable:$true] %s16
      %19 = dma.hbm_to_vmem [thread:$0]  %s0, 256, %s17, [#allocation3]
    $region5: #{tpu_custom_call.1} parent=1 // pred_fallthru
      _
    // Predicated region
    $region6: #{tpu_custom_call.1} parent=1 // pred_check
      _
    $region7: #{tpu_custom_call.1} parent=1 // pred_check_branch
      %21 = sbr.rel (0) target = $region9
    $region8: #{tpu_custom_call.1} parent=1 // pred_region
      %s23 = ssub.s32 256, 256
      %24 = vsyncadd [#allocation6], %s23
      %s26 = sshll.u32 [#allocation5], 4
      %s27 = int_to_ptr.vmem [resolvable:$true] %s26
      %29 = dma.hbm_to_vmem [thread:$0]  %s1, 256, %s27, [#allocation6]
    $region9: #{tpu_custom_call.1} parent=1 // pred_fallthru
      _
    // Predicated region
    $region10: #{tpu_custom_call.1} parent=1 // pred_check
      _
    $region11: #{tpu_custom_call.1} parent=1 // pred_check_branch
      %31 = sbr.rel (0) target = $region13
    $region12: #{tpu_custom_call.1} parent=1 // pred_region
      %32 = dma.done [#allocation3], 256
    $region13: #{tpu_custom_call.1} parent=1 // pred_fallthru
      _
    // Predicated region
    $region14: #{tpu_custom_call.1} parent=1 // pred_check
      _
    $region15: #{tpu_custom_call.1} parent=1 // pred_check_branch
      %34 = sbr.rel (0) target = $region17
    $region16: #{tpu_custom_call.1} parent=1 // pred_region
      %35 = dma.done [#allocation6], 256
    $region17: #{tpu_custom_call.1} parent=1 // pred_fallthru
      _
    %v36 = vld [vmem:[#allocation2] sm:$0xff]
    %v37 = vld [vmem:[#allocation2 + $0x8] sm:$0xff]
    %v38 = vld [vmem:[#allocation5] sm:$0xff]
    %v39 = vld [vmem:[#allocation5 + $0x8] sm:$0xff]
    %v40 = vmax.f32 %v36, 0.0
    %v41 = vmax.f32 %v37, 0.0
    %vm42 = vcmp.gt.f32.partialorder %v38, 0.0
    %vm43 = vcmp.gt.f32.partialorder %v39, 0.0
    %v44 = vsel %vm42, %v40, 0.0
    %v45 = vsel %vm43, %v41, 0.0
    %46 = vst [vmem:[#allocation7] sm:$0xff] %v44
    %47 = vst [vmem:[#allocation7 + $0x8] sm:$0xff] %v45
    // Predicated region
    $region18: #{tpu_custom_call.1} parent=1 // pred_check
      _
    $region19: #{tpu_custom_call.1} parent=1 // pred_check_branch
      %49 = sbr.rel (0) target = $region21
    $region20: #{tpu_custom_call.1} parent=1 // pred_region
      %s51 = ssub.s32 256, 256
      %52 = vsyncadd [#allocation4], %s51
      %s54 = sshll.u32 [#allocation7], 4
      %s55 = int_to_ptr.vmem [resolvable:$true] %s54
      %57 = dma.vmem_to_hbm [thread:$0]  %s55, 256, %s2, [#allocation4]
    $region21: #{tpu_custom_call.1} parent=1 // pred_fallthru
      _
    // Predicated region
    $region22: #{tpu_custom_call.1} parent=1 // pred_check
      _
    $region23: #{tpu_custom_call.1} parent=1 // pred_check_branch
      %59 = sbr.rel (0) target = $region25
    $region24: #{tpu_custom_call.1} parent=1 // pred_region
      %60 = dma.done [#allocation4], 256
    $region25: #{tpu_custom_call.1} parent=1 // pred_fallthru
      _
    %61 = vsyncpa [#allocation3], 1
    %62 = vsyncpa [#allocation6], 1
    %63 = vsyncpa [#allocation4], 1

</llo_original>
